<compile_context>
chip_gen: v6e
topology: v6e:2x2x1
jax: 0.10.0
libtpu: 0.0.40
codegen_flags: <defaults>
</compile_context>

<pallas_src>
import jax
import jax.numpy as jnp
from jax.experimental import pallas as pl
from jax.experimental.pallas import tpu as pltpu


def _separate_linear_kernel(x_ref, w_ref, b_ref, o_ref):
    # x_ref: (TILE_N, C), w_ref: (C, O), b_ref: (1, O), o_ref: (TILE_N, O)
    acc = jnp.dot(x_ref[...], w_ref[...], preferred_element_type=jnp.float32)
    o_ref[...] = (acc + b_ref[...]).astype(o_ref.dtype)


def separate_linear(x, weights, biases, *, tile_n=1024):
    """Pallas implementation of SeparateLinear.forward.

    Args:
      x:        (N, C) input features.
      weights:  (O, C) stacked per-linear weights (each torch Linear is (1, C)).
      biases:   (O,)   stacked per-linear biases.
      tile_n:   rows per grid step (multiple of 8; 512-2048 is the sweet spot).
    Returns:
      (N, O) == torch.cat([lin(x) for lin in linears], dim=1)
    """
    n, c = x.shape
    o = weights.shape[0]

    w_t = weights.T                  # (C, O): tiny, one-time; lane-dense output
    b = biases.reshape(1, o)         # (1, O) for sublane broadcast in-kernel

    # Row tile: full extent if N is small, otherwise a multiple of 8.
    tile_n = min(tile_n, n)
    if tile_n < n:
        tile_n = max(8, (tile_n // 8) * 8)
    grid = (pl.cdiv(n, tile_n),)

    itemsize = jnp.dtype(x.dtype).itemsize
    cost = pl.CostEstimate(
        flops=2 * n * c * o,
        transcendentals=0,
        bytes_accessed=itemsize * (n * c + c * o + o + n * o),
    )

    return pl.pallas_call(
        _separate_linear_kernel,
        out_shape=jax.ShapeDtypeStruct((n, o), x.dtype),
        grid_spec=pl.GridSpec(
            grid=grid,
            in_specs=[
                # x streams row blocks through VMEM (double-buffered).
                pl.BlockSpec((tile_n, c), lambda i: (i, 0)),
                # Weight / bias stay resident across the whole grid.
                pl.BlockSpec((c, o), lambda i: (0, 0)),
                pl.BlockSpec((1, o), lambda i: (0, 0)),
            ],
            out_specs=pl.BlockSpec((tile_n, o), lambda i: (i, 0)),
        ),
        compiler_params=pltpu.CompilerParams(
            dimension_semantics=("parallel",)),  # lets v7x split rows over 2 TCs
        cost_estimate=cost,
    )(x, w_t, b)


if __name__ == "__main__":
    key = jax.random.PRNGKey(0)
    kx, kw, kb, kx2 = jax.random.split(key, 4)

    # Small shapes consistent with the module: x is (N, in_channel).
    N = 16            # number of points / rows
    IN_CHANNEL = 32   # in_channel
    OUT_CHANNELS = 4  # out_channels (int) -> 4 separate Linear(in_channel, 1)

    x = jax.random.normal(kx, (N, IN_CHANNEL), dtype=jnp.float32)

    # Deterministic params mimicking nn.Linear's uniform(-1/sqrt(C), 1/sqrt(C)).
    bound = 1.0 / (IN_CHANNEL ** 0.5)
    weights = jax.random.uniform(
        kw, (OUT_CHANNELS, IN_CHANNEL), dtype=jnp.float32,
        minval=-bound, maxval=bound)
    biases = jax.random.uniform(
        kb, (OUT_CHANNELS,), dtype=jnp.float32, minval=-bound, maxval=bound)

    # Case 1: tiny N (single full-extent block).
    out = separate_linear(x, weights, biases)
    out = jax.block_until_ready(out)
    ref = x @ weights.T + biases[None, :]
    assert out.shape == (N, OUT_CHANNELS)
    assert jnp.allclose(out, ref, atol=1e-5, rtol=1e-5)

    # Case 2: larger N exercising the tiled grid + ragged last block
    # (2056 rows -> grid of 3 with a masked 8-row tail at tile_n=1024).
    N2 = 2056
    x2 = jax.random.normal(kx2, (N2, IN_CHANNEL), dtype=jnp.float32)
    out2 = separate_linear(x2, weights, biases)
    out2 = jax.block_until_ready(out2)
    ref2 = x2 @ weights.T + biases[None, :]
    assert out2.shape == (N2, OUT_CHANNELS)
    assert jnp.allclose(out2, ref2, atol=1e-5, rtol=1e-5)

    print("KERNEL_OK")
</pallas_src>

<mosaic_0001>
module attributes {stable_mosaic.version = 11 : i64} {
  func.func @_separate_linear_kernel(%arg0: i32, %arg1: memref<16x32xf32, #tpu.memory_space<vmem>>, %arg2: memref<32x4xf32, #tpu.memory_space<vmem>>, %arg3: memref<1x4xf32, #tpu.memory_space<vmem>>, %arg4: memref<16x4xf32, #tpu.memory_space<vmem>>) attributes {dimension_semantics = [#tpu.dimension_semantics<parallel>], iteration_bounds = array<i64: 1>, scalar_prefetch = 0 : i64, scratch_operands = 0 : i64, tpu.core_type = #tpu.core_type<tc>, window_params = [{transform_indices = @transform_0, window_bounds = array<i64: 16, 32>}, {pipeline_mode = #tpu.pipeline_mode<synchronous>, transform_indices = @transform_1, window_bounds = array<i64: 32, 4>}, {pipeline_mode = #tpu.pipeline_mode<synchronous>, transform_indices = @transform_2, window_bounds = array<i64: 1, 4>}, {transform_indices = @transform_3, window_bounds = array<i64: 16, 4>}]} {
    %c0 = arith.constant 0 : index
    %c0_0 = arith.constant 0 : index
    %0 = vector.load %arg1[%c0, %c0_0] : memref<16x32xf32, #tpu.memory_space<vmem>>, vector<16x32xf32>
    %c0_1 = arith.constant 0 : index
    %c0_2 = arith.constant 0 : index
    %1 = vector.load %arg2[%c0_1, %c0_2] : memref<32x4xf32, #tpu.memory_space<vmem>>, vector<32x4xf32>
    %cst = arith.constant dense<0.000000e+00> : vector<16x4xf32>
    %2 = tpu.matmul %0, %1, %cst {dimension_numbers = #tpu.dot_dimension_numbers<[1], [0], [0], [1], [0, 0, 1, 1], [], []>} : vector<16x32xf32>, vector<32x4xf32>, vector<16x4xf32> -> vector<16x4xf32>
    %c0_3 = arith.constant 0 : index
    %c0_4 = arith.constant 0 : index
    %3 = vector.load %arg3[%c0_3, %c0_4] : memref<1x4xf32, #tpu.memory_space<vmem>>, vector<1x4xf32>
    %4 = vector.broadcast %3 : vector<1x4xf32> to vector<16x4xf32>
    %5 = arith.addf %2, %4 : vector<16x4xf32>
    %c0_5 = arith.constant 0 : index
    %c0_6 = arith.constant 0 : index
    %6 = vector.load %arg4[%c0_5, %c0_6] : memref<16x4xf32, #tpu.memory_space<vmem>>, vector<16x4xf32>
    tpu.vector_store %arg4[%c0_5, %c0_6], %5 {strides = array<i32>} : memref<16x4xf32, #tpu.memory_space<vmem>>, vector<16x4xf32>,
    return
  }
  func.func @transform_0(%arg0: i32) -> (i32, i32) {
    %c0_i32 = arith.constant 0 : i32
    %c0_i32_0 = arith.constant 0 : i32
    return %arg0, %c0_i32 : i32, i32
  }
  func.func @transform_1(%arg0: i32) -> (i32, i32) {
    %c0_i32 = arith.constant 0 : i32
    %c0_i32_0 = arith.constant 0 : i32
    %c0_i32_1 = arith.constant 0 : i32
    return %c0_i32, %c0_i32_0 : i32, i32
  }
  func.func @transform_2(%arg0: i32) -> (i32, i32) {
    %c0_i32 = arith.constant 0 : i32
    %c0_i32_0 = arith.constant 0 : i32
    %c0_i32_1 = arith.constant 0 : i32
    return %c0_i32, %c0_i32_0 : i32, i32
  }
  func.func @transform_3(%arg0: i32) -> (i32, i32) {
    %c0_i32 = arith.constant 0 : i32
    %c0_i32_0 = arith.constant 0 : i32
    return %arg0, %c0_i32 : i32, i32
  }
}

</mosaic_0001>

<llo_original>
// kernel: tpu_custom_call.1
$region0: #{tpu_custom_call.1}
  #allocation0 [shape = 'u32[]', space=smem, size = 0x4, offset = 0x4, fixed_abs, tag = 'smem constant byte address 0x4 - core index']
  #allocation1 [shape = 'u32[144,128]{1,0:T(1,128)}', space=vmem, size = 0x12000, scoped, tag = 'internal scratch']
  %s0 = inlined_call_operand.vmem [shape: f32[16,32], index: 0, kind: input, shape index: {}]
  %s1 = inlined_call_operand.vmem [shape: f32[32,4], index: 1, kind: input, shape index: {}]
  %s2 = inlined_call_operand.vmem [shape: f32[1,4], index: 2, kind: input, shape index: {}]
  %s3 = inlined_call_operand.vmem [shape: f32[16,4], index: 3, kind: output, shape index: {}]
  %s4 = sld [smem:[#allocation0]]
  $region22: #{tpu_custom_call.1} parent=0
    _
  %s6 = ssub.s32 1, %s4
  %s7 = scalar_select 0, %s6, %s4
  // Predicated region
  $region2: #{tpu_custom_call.1} parent=0 // pred_check
    _
  $region3: #{tpu_custom_call.1} parent=0 // pred_check_branch
    %9 = sbr.rel (0) target = $region5
  $region4: #{tpu_custom_call.1} parent=0 // pred_region
    _
  $region5: #{tpu_custom_call.1} parent=0 // pred_fallthru
    _
  // Predicated region
  $region6: #{tpu_custom_call.1} parent=0 // pred_check
    _
  $region7: #{tpu_custom_call.1} parent=0 // pred_check_branch
    %11 = sbr.rel (0) target = $region9
  $region8: #{tpu_custom_call.1} parent=0 // pred_region
    _
  $region9: #{tpu_custom_call.1} parent=0 // pred_fallthru
    _
  // Predicated region
  $region10: #{tpu_custom_call.1} parent=0 // pred_check
    _
  $region11: #{tpu_custom_call.1} parent=0 // pred_check_branch
    %13 = sbr.rel (0) target = $region13
  $region12: #{tpu_custom_call.1} parent=0 // pred_region
    _
  $region13: #{tpu_custom_call.1} parent=0 // pred_fallthru
    _
  %v14 = vld [vmem:[%s0] sm:$0xff]
  %v15 = vld [vmem:[%s0 + $0x8] sm:$0xff]
  %v16 = vld [vmem:[%s1] sm:$0xff]
  %v17 = vld [vmem:[%s1 + $0x8] sm:$0xff]
  %v18 = vld [vmem:[%s1 + $0x10] sm:$0xff]
  %v19 = vld [vmem:[%s1 + $0x18] sm:$0xff]
  %v20 = vld [vmem:[%s2] sm:$0x1]
  %v22 = vlaneseq
  %v23 = vshrl.u32 %v22, 7
  %v24 = vsub.s32 0, %v23
  %v25 = vrot.slane %v20, %v24
  %vm27 = vcmask 261120
  %v29 = vsel %vm27, %v14, 0
  %v32 = vsel %vm27, %v15, 0
  %34 = vmatprep.subr.mxu0 0.0
  %35 = vmatpush1.msra.mxu0 0.0
  %36 = vmatprep.subr.mxu0 0.0
  %37 = vmatpush1.msra.mxu0 0.0
  %38 = vmatprep.subr.mxu0 0.0
  %39 = vmatpush1.msra.mxu0 0.0
  %40 = vmatprep.subr.mxu0 0.0
  %41 = vmatpush1.msra.mxu0 0.0
  %42 = vmatprep.subr.mxu0 0.0
  %43 = vmatpush1.msra.mxu0 0.0
  %44 = vmatprep.subr.mxu0 0.0
  %45 = vmatpush1.msra.mxu0 0.0
  %46 = vmatprep.subr.mxu0 0.0
  %47 = vmatpush1.msra.mxu0 0.0
  %48 = vmatprep.subr.mxu0 0.0
  %49 = vmatpush1.msra.mxu0 0.0
  %50 = vmatprep.subr.mxu0 0.0
  %51 = vmatpush1.msra.mxu0 0.0
  %52 = vmatprep.subr.mxu0 0.0
  %53 = vmatpush1.msra.mxu0 0.0
  %54 = vmatprep.subr.mxu0 0.0
  %55 = vmatpush1.msra.mxu0 0.0
  %56 = vmatprep.subr.mxu0 0.0
  %57 = vmatpush1.msra.mxu0 0.0
  %58 = vmatprep.subr.mxu0 0.0
  %59 = vmatpush1.msra.mxu0 %v19
  %60 = vmatprep.subr.mxu0 0.0
  %61 = vmatpush1.msra.mxu0 %v18
  %62 = vmatprep.subr.mxu0 0.0
  %63 = vmatpush1.msra.mxu0 %v17
  %64 = vmatprep.subr.mxu0 0.0
  %65 = vmatpush1.msra.mxu0 %v16
  %66 = vmatprep.subr.mxu0 0.0
  %67 = vmatpush2.msra.mxu0 0.0
  %68 = vmatprep.subr.mxu0 0.0
  %69 = vmatpush2.msra.mxu0 0.0
  %70 = vmatprep.subr.mxu0 0.0
  %71 = vmatpush2.msra.mxu0 0.0
  %72 = vmatprep.subr.mxu0 0.0
  %73 = vmatpush2.msra.mxu0 0.0
  %74 = vmatprep.subr.mxu0 0.0
  %75 = vmatpush2.msra.mxu0 0.0
  %76 = vmatprep.subr.mxu0 0.0
  %77 = vmatpush2.msra.mxu0 0.0
  %78 = vmatprep.subr.mxu0 0.0
  %79 = vmatpush2.msra.mxu0 0.0
  %80 = vmatprep.subr.mxu0 0.0
  %81 = vmatpush2.msra.mxu0 0.0
  %82 = vmatprep.subr.mxu0 0.0
  %83 = vmatpush2.msra.mxu0 0.0
  %84 = vmatprep.subr.mxu0 0.0
  %85 = vmatpush2.msra.mxu0 0.0
  %86 = vmatprep.subr.mxu0 0.0
  %87 = vmatpush2.msra.mxu0 0.0
  %88 = vmatprep.subr.mxu0 0.0
  %89 = vmatpush2.msra.mxu0 0.0
  %90 = vmatprep.subr.mxu0 0.0
  %91 = vmatpush2.msra.mxu0 0.0
  %92 = vmatprep.subr.mxu0 0.0
  %93 = vmatpush2.msra.mxu0 0.0
  %94 = vmatprep.subr.mxu0 0.0
  %95 = vmatpush2.msra.mxu0 0.0
  %96 = vmatprep.subr.mxu0 0.0
  %97 = vmatpush2.msra.mxu0 0.0
  %98 = vmatprep.mubr.f32.mxu0 0.0
  %99 = vmatmul.mubr.f32.gmra.mxu0 %v29
  %v100 = vpop.f32.mrf.mxu0
  %v101 = vadd.f32 %v25, %v100
  %v102 = vpop.f32.mrf.mxu0
  %103 = vmatprep.mubr.f32.mxu0 0.0
  %104 = vmatmul.mubr.f32.gmra.mxu0 %v32
  %v105 = vpop.f32.mrf.mxu0
  %v106 = vadd.f32 %v25, %v105
  %v107 = vpop.f32.mrf.mxu0
  %108 = vdwg.mxu0
  %vm109 = vcmask 31744
  %110 = vst.msk [vmem:[%s3] sm:$0xff] %vm109, %v101
  %111 = vst.msk [vmem:[%s3 + $0x8] sm:$0xff] %vm109, %v106
  // Predicated region
  $region14: #{tpu_custom_call.1} parent=0 // pred_check
    _
  $region15: #{tpu_custom_call.1} parent=0 // pred_check_branch
    %113 = sbr.rel (0) target = $region17
  $region16: #{tpu_custom_call.1} parent=0 // pred_region
    _
  $region17: #{tpu_custom_call.1} parent=0 // pred_fallthru
    _
  // Predicated region
  $region18: #{tpu_custom_call.1} parent=0 // pred_check
    _
  $region19: #{tpu_custom_call.1} parent=0 // pred_check_branch
    %115 = sbr.rel (0) target = $region21
  $region20: #{tpu_custom_call.1} parent=0 // pred_region
    _
  $region21: #{tpu_custom_call.1} parent=0 // pred_fallthru
    _

</llo_original>
